<compile_context>
chip_gen: v6e
topology: v6e:2x2x1
jax: 0.10.0
libtpu: 0.0.40
codegen_flags: <defaults>
</compile_context>

<pallas_src>
import math
import functools

import jax
import jax.numpy as jnp
from jax.experimental import pallas as pl
from jax.experimental.pallas import tpu as pltpu

LANE = 128
SUBLANE = 8
MAX_TILE_R = 512          # 512 rows * 128 lanes = 65536 boxes per grid step


def _make_kernel(loc_loss_type, has_weight, n, tile_r, num_tiles):
    tile_boxes = tile_r * LANE
    needs_mask = n < num_tiles * tile_boxes

    def compute(pred_ref, target_ref, weight_ref, out_ref, acc_ref):
        t = pl.program_id(0)

        @pl.when(t == 0)
        def _():
            acc_ref[...] = jnp.zeros_like(acc_ref)

        # Dense (tile_r, 128) per-channel slabs.
        pred_left = pred_ref[0]
        pred_top = pred_ref[1]
        pred_right = pred_ref[2]
        pred_bottom = pred_ref[3]
        target_left = target_ref[0]
        target_top = target_ref[1]
        target_right = target_ref[2]
        target_bottom = target_ref[3]

        target_aera = (target_left + target_right) * (target_top + target_bottom)
        pred_aera = (pred_left + pred_right) * (pred_top + pred_bottom)

        w_intersect = (jnp.minimum(pred_left, target_left)
                       + jnp.minimum(pred_right, target_right))
        h_intersect = (jnp.minimum(pred_bottom, target_bottom)
                       + jnp.minimum(pred_top, target_top))
        g_w_intersect = (jnp.maximum(pred_left, target_left)
                         + jnp.maximum(pred_right, target_right))
        g_h_intersect = (jnp.maximum(pred_bottom, target_bottom)
                         + jnp.maximum(pred_top, target_top))

        ac_uion = g_w_intersect * g_h_intersect
        area_intersect = w_intersect * h_intersect
        area_union = target_aera + pred_aera - area_intersect

        ious = (area_intersect + 1.0) * pl.reciprocal(area_union + 1.0,
                                                      approx=False)

        if loc_loss_type == 'iou':
            losses = -jnp.log(ious)
        elif loc_loss_type == 'linear_iou':
            losses = 1.0 - ious
        elif loc_loss_type == 'giou':
            gious = ious - (ac_uion - area_union) * pl.reciprocal(ac_uion,
                                                                  approx=False)
            losses = 1.0 - gious
        elif loc_loss_type in ('diou', 'ciou'):
            rou_square = 0.25 * (
                jnp.square(target_right - pred_right + pred_left - target_left)
                + jnp.square(target_bottom - pred_bottom + pred_top - target_top))
            c_square = jnp.square(g_w_intersect) + jnp.square(g_h_intersect)
            center_term = rou_square * pl.reciprocal(c_square + 1e-05,
                                                     approx=False)
            if loc_loss_type == 'diou':
                losses = 1.0 - (ious - center_term)
            else:  # 'ciou'
                diou_loss = 1.0 - ious + center_term
                w_gt = target_left + target_right
                h_gt = target_top + target_bottom + 1e-05
                w_pred = pred_left + pred_right
                h_pred = pred_top + pred_bottom + 1e-05
                v = (4.0 / math.pi ** 2) * jnp.square(
                    jnp.arctan(w_gt * pl.reciprocal(h_gt, approx=False))
                    - jnp.arctan(w_pred * pl.reciprocal(h_pred, approx=False)))
                # 'with torch.no_grad()' only matters for autograd; the
                # forward value is identical.
                s = 1.0 - ious
                alpha = v * pl.reciprocal(s + v + 1e-05, approx=False)
                losses = diou_loss + alpha * v
        else:
            raise NotImplementedError(loc_loss_type)

        if needs_mask:
            # Zero out padded lanes BEFORE the weight multiply so NaN/inf
            # intermediates from padded zeros can never reach the reduction.
            row = jax.lax.broadcasted_iota(jnp.int32, (tile_r, LANE), 0)
            lane = jax.lax.broadcasted_iota(jnp.int32, (tile_r, LANE), 1)
            idx = t * tile_boxes + row * LANE + lane
            losses = jnp.where(idx < n, losses, 0.0)

        if has_weight:
            losses = losses * weight_ref[...]

        # Vreg-shaped partial sum: pure VPU adds per step; the expensive
        # cross-lane/sublane reduce happens only once, in the epilogue.
        acc_ref[...] += losses.reshape(tile_r // SUBLANE, SUBLANE, LANE).sum(axis=0)

        @pl.when(t == pl.num_programs(0) - 1)
        def _():
            out_ref[0, 0] = jnp.sum(acc_ref[...])

    if has_weight:
        def kernel(pred_ref, target_ref, weight_ref, out_ref, acc_ref):
            compute(pred_ref, target_ref, weight_ref, out_ref, acc_ref)
    else:
        def kernel(pred_ref, target_ref, out_ref, acc_ref):
            compute(pred_ref, target_ref, None, out_ref, acc_ref)
    return kernel


@functools.partial(jax.jit, static_argnames=('loc_loss_type',))
def fcos_iou_loss(pred, target, weight=None, loc_loss_type='iou'):
    """pred, target: (N, 4) float32; weight: optional (N,) float32. Returns scalar."""
    n = pred.shape[0]

    # Box axis -> (rows, 128 lanes); rows padded to a multiple of 8 sublanes.
    r = -(-n // LANE)
    r = max(SUBLANE, -(-r // SUBLANE) * SUBLANE)
    tile_r = min(MAX_TILE_R, r)
    num_tiles = -(-r // tile_r)
    r_padded = num_tiles * tile_r
    np_ = r_padded * LANE

    # TODO(synk): if the producer can emit (4, N) (channel-major) directly,
    # this transpose+pad round-trip through HBM disappears entirely.
    pred_t = jnp.pad(pred.astype(jnp.float32).T,
                     ((0, 0), (0, np_ - n))).reshape(4, r_padded, LANE)
    target_t = jnp.pad(target.astype(jnp.float32).T,
                       ((0, 0), (0, np_ - n))).reshape(4, r_padded, LANE)

    has_weight = weight is not None
    args = [pred_t, target_t]
    in_specs = [
        pl.BlockSpec((4, tile_r, LANE), lambda i: (0, i, 0)),
        pl.BlockSpec((4, tile_r, LANE), lambda i: (0, i, 0)),
    ]
    if has_weight:
        weight_t = jnp.pad(weight.astype(jnp.float32),
                           (0, np_ - n)).reshape(r_padded, LANE)
        args.append(weight_t)
        in_specs.append(pl.BlockSpec((tile_r, LANE), lambda i: (i, 0)))

    kernel = _make_kernel(loc_loss_type, has_weight, n, tile_r, num_tiles)

    out = pl.pallas_call(
        kernel,
        out_shape=jax.ShapeDtypeStruct((1, 1), jnp.float32),
        grid_spec=pltpu.PrefetchScalarGridSpec(
            num_scalar_prefetch=0,
            grid=(num_tiles,),
            in_specs=in_specs,
            out_specs=pl.BlockSpec((1, 1), lambda i: (0, 0),
                                   memory_space=pltpu.SMEM),
            scratch_shapes=[pltpu.VMEM((SUBLANE, LANE), jnp.float32)],
        ),
        compiler_params=pltpu.CompilerParams(
            dimension_semantics=("arbitrary",),   # accumulator carries across the grid
            vmem_limit_bytes=32 * 1024 * 1024,
        ),
    )(*args)
    return out[0, 0]


def _reference(pred, target, weight=None, loc_loss_type='iou'):
    """Pure-JAX reference mirroring the PyTorch forward."""
    pl_, pt, pr, pb = pred[:, 0], pred[:, 1], pred[:, 2], pred[:, 3]
    tl, tt, tr, tb = target[:, 0], target[:, 1], target[:, 2], target[:, 3]
    target_aera = (tl + tr) * (tt + tb)
    pred_aera = (pl_ + pr) * (pt + pb)
    w_i = jnp.minimum(pl_, tl) + jnp.minimum(pr, tr)
    h_i = jnp.minimum(pb, tb) + jnp.minimum(pt, tt)
    gw = jnp.maximum(pl_, tl) + jnp.maximum(pr, tr)
    gh = jnp.maximum(pb, tb) + jnp.maximum(pt, tt)
    ac = gw * gh
    a_i = w_i * h_i
    a_u = target_aera + pred_aera - a_i
    ious = (a_i + 1.0) / (a_u + 1.0)
    gious = ious - (ac - a_u) / ac
    if loc_loss_type == 'iou':
        losses = -jnp.log(ious)
    elif loc_loss_type == 'linear_iou':
        losses = 1 - ious
    elif loc_loss_type == 'giou':
        losses = 1 - gious
    elif loc_loss_type == 'diou':
        rou2 = 0.25 * ((tr - pr + pl_ - tl) ** 2 + (tb - pb + pt - tt) ** 2)
        c2 = gw ** 2 + gh ** 2
        losses = 1 - (ious - rou2 / (c2 + 1e-05))
    elif loc_loss_type == 'ciou':
        rou2 = 0.25 * ((tr - pr + pl_ - tl) ** 2 + (tb - pb + pt - tt) ** 2)
        c2 = gw ** 2 + gh ** 2
        diou_loss = 1.0 - ious + rou2 / (c2 + 1e-05)
        w_gt, h_gt = tl + tr, tt + tb + 1e-05
        w_pr, h_pr = pl_ + pr, pt + pb + 1e-05
        v = 4 / math.pi ** 2 * (jnp.arctan(w_gt / h_gt) - jnp.arctan(w_pr / h_pr)) ** 2
        alpha = v / ((1.0 - ious) + v + 1e-05)
        losses = diou_loss + alpha * v
    else:
        raise NotImplementedError
    if weight is not None:
        return (losses * weight).sum()
    return losses.sum()


if __name__ == "__main__":
    key = jax.random.PRNGKey(0)
    k1, k2, k3 = jax.random.split(key, 3)
    n = 200  # number of boxes; pred/target are (N, 4) like the PyTorch module
    pred = jax.random.uniform(k1, (n, 4), jnp.float32, minval=0.1, maxval=5.0)
    target = jax.random.uniform(k2, (n, 4), jnp.float32, minval=0.1, maxval=5.0)
    weight = jax.random.uniform(k3, (n,), jnp.float32, minval=0.0, maxval=2.0)

    ok = True
    for loss_type in ('iou', 'linear_iou', 'giou', 'diou', 'ciou'):
        for w in (None, weight):
            out = fcos_iou_loss(pred, target, w, loc_loss_type=loss_type)
            out = jax.block_until_ready(out)
            ref = _reference(pred, target, w, loc_loss_type=loss_type)
            if not jnp.allclose(out, ref, rtol=1e-4, atol=1e-3):
                ok = False
                print(f"MISMATCH {loss_type} weight={'yes' if w is not None else 'no'}: "
                      f"{out} vs {ref}")
    if ok:
        print("KERNEL_OK")
</pallas_src>

<mosaic_0001>
module attributes {stable_mosaic.version = 11 : i64} {
  func.func @kernel(%arg0: i32, %arg1: memref<4x8x128xf32, #tpu.memory_space<vmem>>, %arg2: memref<4x8x128xf32, #tpu.memory_space<vmem>>, %arg3: memref<1x1xf32, #tpu.memory_space<smem>>, %arg4: memref<8x128xf32, #tpu.memory_space<vmem>>) attributes {dimension_semantics = [#tpu.dimension_semantics<arbitrary>], iteration_bounds = array<i64: 1>, scalar_prefetch = 0 : i64, scratch_operands = 1 : i64, tpu.core_type = #tpu.core_type<tc>, window_params = [{transform_indices = @transform_0, window_bounds = array<i64: 4, 8, 128>}, {transform_indices = @transform_1, window_bounds = array<i64: 4, 8, 128>}, {transform_indices = @transform_2, window_bounds = array<i64: 1, 1>}]} {
    %c0_i32 = arith.constant 0 : i32
    %0 = arith.cmpi eq, %arg0, %c0_i32 : i32
    %1 = arith.extui %0 : i1 to i32
    %c0_i32_0 = arith.constant 0 : i32
    %2 = arith.cmpi ne, %1, %c0_i32_0 : i32
    scf.if %2 {
      %cst_31 = arith.constant 0.000000e+00 : f32
      %63 = vector.broadcast %cst_31 : f32 to vector<8x128xf32>
      %c0_32 = arith.constant 0 : index
      %c0_33 = arith.constant 0 : index
      %64 = vector.load %arg4[%c0_32, %c0_33] : memref<8x128xf32, #tpu.memory_space<vmem>>, vector<8x128xf32>
      tpu.vector_store %arg4[%c0_32, %c0_33], %63 {strides = array<i32>} : memref<8x128xf32, #tpu.memory_space<vmem>>, vector<8x128xf32>,
    } else {
    }
    %c0 = arith.constant 0 : index
    %c0_1 = arith.constant 0 : index
    %c0_2 = arith.constant 0 : index
    %3 = vector.load %arg1[%c0, %c0_1, %c0_2] : memref<4x8x128xf32, #tpu.memory_space<vmem>>, vector<1x8x128xf32>
    %4 = vector.shape_cast %3 : vector<1x8x128xf32> to vector<8x128xf32>
    %c1 = arith.constant 1 : index
    %c0_3 = arith.constant 0 : index
    %c0_4 = arith.constant 0 : index
    %5 = vector.load %arg1[%c1, %c0_3, %c0_4] : memref<4x8x128xf32, #tpu.memory_space<vmem>>, vector<1x8x128xf32>
    %6 = vector.shape_cast %5 : vector<1x8x128xf32> to vector<8x128xf32>
    %c2 = arith.constant 2 : index
    %c0_5 = arith.constant 0 : index
    %c0_6 = arith.constant 0 : index
    %7 = vector.load %arg1[%c2, %c0_5, %c0_6] : memref<4x8x128xf32, #tpu.memory_space<vmem>>, vector<1x8x128xf32>
    %8 = vector.shape_cast %7 : vector<1x8x128xf32> to vector<8x128xf32>
    %c3 = arith.constant 3 : index
    %c0_7 = arith.constant 0 : index
    %c0_8 = arith.constant 0 : index
    %9 = vector.load %arg1[%c3, %c0_7, %c0_8] : memref<4x8x128xf32, #tpu.memory_space<vmem>>, vector<1x8x128xf32>
    %10 = vector.shape_cast %9 : vector<1x8x128xf32> to vector<8x128xf32>
    %c0_9 = arith.constant 0 : index
    %c0_10 = arith.constant 0 : index
    %c0_11 = arith.constant 0 : index
    %11 = vector.load %arg2[%c0_9, %c0_10, %c0_11] : memref<4x8x128xf32, #tpu.memory_space<vmem>>, vector<1x8x128xf32>
    %12 = vector.shape_cast %11 : vector<1x8x128xf32> to vector<8x128xf32>
    %c1_12 = arith.constant 1 : index
    %c0_13 = arith.constant 0 : index
    %c0_14 = arith.constant 0 : index
    %13 = vector.load %arg2[%c1_12, %c0_13, %c0_14] : memref<4x8x128xf32, #tpu.memory_space<vmem>>, vector<1x8x128xf32>
    %14 = vector.shape_cast %13 : vector<1x8x128xf32> to vector<8x128xf32>
    %c2_15 = arith.constant 2 : index
    %c0_16 = arith.constant 0 : index
    %c0_17 = arith.constant 0 : index
    %15 = vector.load %arg2[%c2_15, %c0_16, %c0_17] : memref<4x8x128xf32, #tpu.memory_space<vmem>>, vector<1x8x128xf32>
    %16 = vector.shape_cast %15 : vector<1x8x128xf32> to vector<8x128xf32>
    %c3_18 = arith.constant 3 : index
    %c0_19 = arith.constant 0 : index
    %c0_20 = arith.constant 0 : index
    %17 = vector.load %arg2[%c3_18, %c0_19, %c0_20] : memref<4x8x128xf32, #tpu.memory_space<vmem>>, vector<1x8x128xf32>
    %18 = vector.shape_cast %17 : vector<1x8x128xf32> to vector<8x128xf32>
    %19 = arith.addf %12, %16 : vector<8x128xf32>
    %20 = arith.addf %14, %18 : vector<8x128xf32>
    %21 = arith.mulf %19, %20 : vector<8x128xf32>
    %22 = arith.addf %4, %8 : vector<8x128xf32>
    %23 = arith.addf %6, %10 : vector<8x128xf32>
    %24 = arith.mulf %22, %23 : vector<8x128xf32>
    %25 = arith.minimumf %4, %12 : vector<8x128xf32>
    %26 = arith.minimumf %8, %16 : vector<8x128xf32>
    %27 = arith.addf %25, %26 : vector<8x128xf32>
    %28 = arith.minimumf %10, %18 : vector<8x128xf32>
    %29 = arith.minimumf %6, %14 : vector<8x128xf32>
    %30 = arith.addf %28, %29 : vector<8x128xf32>
    %31 = arith.mulf %27, %30 : vector<8x128xf32>
    %32 = arith.addf %21, %24 : vector<8x128xf32>
    %33 = arith.subf %32, %31 : vector<8x128xf32>
    %cst = arith.constant 1.000000e+00 : f32
    %34 = vector.broadcast %cst : f32 to vector<8x128xf32>
    %35 = arith.addf %31, %34 : vector<8x128xf32>
    %cst_21 = arith.constant 1.000000e+00 : f32
    %36 = vector.broadcast %cst_21 : f32 to vector<8x128xf32>
    %37 = arith.addf %33, %36 : vector<8x128xf32>
    %38 = tpu.reciprocal %37 : vector<8x128xf32> -> vector<8x128xf32>
    %39 = arith.mulf %35, %38 : vector<8x128xf32>
    %40 = math.log %39 : vector<8x128xf32>
    %cst_22 = arith.constant 0.000000e+00 : f32
    %41 = vector.broadcast %cst_22 : f32 to vector<8x128xf32>
    %42 = arith.subf %41, %40 : vector<8x128xf32>
    %43 = tpu.iota {dimensions = array<i32: 0>} : vector<8x128xi32>
    %44 = tpu.iota {dimensions = array<i32: 1>} : vector<8x128xi32>
    %c1024_i32 = arith.constant 1024 : i32
    %45 = arith.muli %arg0, %c1024_i32 : i32
    %c128_i32 = arith.constant 128 : i32
    %46 = vector.broadcast %c128_i32 : i32 to vector<8x128xi32>
    %47 = arith.muli %43, %46 : vector<8x128xi32>
    %48 = vector.broadcast %45 : i32 to vector<8x128xi32>
    %49 = arith.addi %48, %47 : vector<8x128xi32>
    %50 = arith.addi %49, %44 : vector<8x128xi32>
    %c200_i32 = arith.constant 200 : i32
    %51 = vector.broadcast %c200_i32 : i32 to vector<8x128xi32>
    %52 = arith.cmpi slt, %50, %51 : vector<8x128xi32>
    %cst_23 = arith.constant 0.000000e+00 : f32
    %53 = vector.broadcast %cst_23 : f32 to vector<8x128xf32>
    %54 = arith.select %52, %42, %53 : vector<8x128xi1>, vector<8x128xf32>
    %c0_24 = arith.constant 0 : index
    %c0_25 = arith.constant 0 : index
    %55 = vector.load %arg4[%c0_24, %c0_25] : memref<8x128xf32, #tpu.memory_space<vmem>>, vector<8x128xf32>
    %56 = vector.shape_cast %54 : vector<8x128xf32> to vector<1x8x128xf32>
    %cst_26 = arith.constant dense<0.000000e+00> : vector<8x128xf32>
    %57 = vector.multi_reduction <add>, %56, %cst_26 [0] : vector<1x8x128xf32> to vector<8x128xf32>
    %58 = arith.addf %55, %57 : vector<8x128xf32>
    %c0_27 = arith.constant 0 : index
    %c0_28 = arith.constant 0 : index
    %59 = vector.load %arg4[%c0_27, %c0_28] : memref<8x128xf32, #tpu.memory_space<vmem>>, vector<8x128xf32>
    tpu.vector_store %arg4[%c0_27, %c0_28], %58 {strides = array<i32>} : memref<8x128xf32, #tpu.memory_space<vmem>>, vector<8x128xf32>,
    %c0_i32_29 = arith.constant 0 : i32
    %60 = arith.cmpi eq, %arg0, %c0_i32_29 : i32
    %61 = arith.extui %60 : i1 to i32
    %c0_i32_30 = arith.constant 0 : i32
    %62 = arith.cmpi ne, %61, %c0_i32_30 : i32
    scf.if %62 {
      %c0_31 = arith.constant 0 : index
      %c0_32 = arith.constant 0 : index
      %63 = vector.load %arg4[%c0_31, %c0_32] : memref<8x128xf32, #tpu.memory_space<vmem>>, vector<8x128xf32>
      %64 = vector.shape_cast %63 : vector<8x128xf32> to vector<1x8x128xf32>
      %cst_33 = arith.constant dense<0.000000e+00> : vector<1xf32>
      %65 = vector.multi_reduction <add>, %64, %cst_33 [1, 2] : vector<1x8x128xf32> to vector<1xf32>
      %66 = vector.shape_cast %65 : vector<1xf32> to vector<1x1x1xf32>
      %67 = vector.extract %66[0, 0, 0] : f32 from vector<1x1x1xf32>
      %c0_34 = arith.constant 0 : index
      %c0_35 = arith.constant 0 : index
      %68 = memref.load %arg3[%c0_34, %c0_35] : memref<1x1xf32, #tpu.memory_space<smem>>
      memref.store %67, %arg3[%c0_34, %c0_35] : memref<1x1xf32, #tpu.memory_space<smem>>
    } else {
    }
    return
  }
  func.func @transform_0(%arg0: i32) -> (i32, i32, i32) {
    %c0_i32 = arith.constant 0 : i32
    %c0_i32_0 = arith.constant 0 : i32
    %c0_i32_1 = arith.constant 0 : i32
    return %c0_i32, %arg0, %c0_i32_0 : i32, i32, i32
  }
  func.func @transform_1(%arg0: i32) -> (i32, i32, i32) {
    %c0_i32 = arith.constant 0 : i32
    %c0_i32_0 = arith.constant 0 : i32
    %c0_i32_1 = arith.constant 0 : i32
    return %c0_i32, %arg0, %c0_i32_0 : i32, i32, i32
  }
  func.func @transform_2(%arg0: i32) -> (i32, i32) {
    %c0_i32 = arith.constant 0 : i32
    %c0_i32_0 = arith.constant 0 : i32
    %c0_i32_1 = arith.constant 0 : i32
    return %c0_i32, %c0_i32_0 : i32, i32
  }
}

</mosaic_0001>

<llo_original>
// kernel: fcos_iou_loss.1
$region0: #{fcos_iou_loss.1}
  #allocation0 [shape = 'u32[]', space=smem, size = 0x4, offset = 0x4, fixed_abs, tag = 'smem constant byte address 0x4 - core index']
  #allocation1 [shape = 'u32[144,128]{1,0:T(1,128)}', space=vmem, size = 0x12000, scoped, tag = 'internal scratch']
  #allocation2 [shape = 'f32[8,128]{1,0:T(8,128)}', space=vmem, size = 0x1000, scoped, tag = 'scratch operand']
  %s0 = inlined_call_operand.vmem [shape: f32[4,8,128], index: 0, kind: input, shape index: {}]
  %s1 = inlined_call_operand.vmem [shape: f32[4,8,128], index: 1, kind: input, shape index: {}]
  %s2 = inlined_call_operand.hbm [shape: f32[1,1], index: 2, kind: output, shape index: {}]
  %s3 = sld [smem:[#allocation0]]
  $region26: #{fcos_iou_loss.1} parent=0
    _
  %s5 = ssub.s32 1, %s3
  %s6 = scalar_select 0, %s5, %s3
  $region1: #{fcos_iou_loss.1} parent=0
    #allocation3 [shape = 'u8[512]{0}', space=smem, size = 0x200, scoped, tag = 'output window, operand 0, single buffered']
    #allocation4 [shape = 's32[1]{0}', space=sflag, size = 0x4, scoped, tag = 'scoped memory for fcos_iou_loss.1']
    %7 = vsyncpa [#allocation4], 0
    // Predicated region
    $region2: #{fcos_iou_loss.1} parent=1 // pred_check
      _
    $region3: #{fcos_iou_loss.1} parent=1 // pred_check_branch
      %9 = sbr.rel (0) target = $region5
    $region4: #{fcos_iou_loss.1} parent=1 // pred_region
      _
    $region5: #{fcos_iou_loss.1} parent=1 // pred_fallthru
      _
    // Predicated region
    $region6: #{fcos_iou_loss.1} parent=1 // pred_check
      _
    $region7: #{fcos_iou_loss.1} parent=1 // pred_check_branch
      %11 = sbr.rel (0) target = $region9
    $region8: #{fcos_iou_loss.1} parent=1 // pred_region
      _
    $region9: #{fcos_iou_loss.1} parent=1 // pred_fallthru
      _
    %p12 = scmp.eq.s32.totalorder 0, 0
    // Predicated region
    $region10: #{fcos_iou_loss.1} parent=1 // pred_check
      %p13 = pneg %p12
    $region11: #{fcos_iou_loss.1} parent=1 // pred_check_branch
      %15 = sbr.rel (%p13) target = $region13
    $region12: #{fcos_iou_loss.1} parent=1 // pred_region
      %16 = vst [vmem:[#allocation2] sm:$0xff] 0.0
    $region13: #{fcos_iou_loss.1} parent=1 // pred_fallthru
      _
    %v17 = vld [vmem:[%s0] sm:$0xff]
    %s18 = scalar_lea.vmem %s0, 8
    %v19 = vld [vmem:[%s18] sm:$0xff]
    %s20 = scalar_lea.vmem %s0, 16
    %v21 = vld [vmem:[%s20] sm:$0xff]
    %s22 = scalar_lea.vmem %s0, 24
    %v23 = vld [vmem:[%s22] sm:$0xff]
    %v24 = vld [vmem:[%s1] sm:$0xff]
    %s25 = scalar_lea.vmem %s1, 8
    %v26 = vld [vmem:[%s25] sm:$0xff]
    %s27 = scalar_lea.vmem %s1, 16
    %v28 = vld [vmem:[%s27] sm:$0xff]
    %s29 = scalar_lea.vmem %s1, 24
    %v30 = vld [vmem:[%s29] sm:$0xff]
    %v31 = vadd.f32 %v24, %v28
    %v32 = vadd.f32 %v26, %v30
    %v33 = vmul.f32 %v31, %v32
    %v34 = vadd.f32 %v17, %v21
    %v35 = vadd.f32 %v19, %v23
    %v36 = vmul.f32 %v34, %v35
    %v37 = vmin.f32 %v17, %v24
    %v38 = vmin.f32 %v21, %v28
    %v39 = vadd.f32 %v37, %v38
    %v40 = vmin.f32 %v23, %v30
    %v41 = vmin.f32 %v19, %v26
    %v42 = vadd.f32 %v40, %v41
    %v43 = vmul.f32 %v39, %v42
    %v44 = vadd.f32 %v33, %v36
    %v45 = vsub.f32 %v44, %v43
    %v46 = vadd.f32 %v43, 1.0
    %v47 = vadd.f32 %v45, 1.0
    %v48 = vrcp.pop %v47
    %v49 = vmul.f32 %v46, %v48
    %v50 = vlog2.pop %v49
    %v51 = vmul.f32 %v50, 0.6931472
    %v52 = vsub.f32 0.0, %v51
    %v53 = vlaneseq
    %v54 = vshrl.u32 %v53, 7
    %v55 = vlaneseq
    %v56 = vand.u32 %v55, 127
    %s57 = smul.u32 0, 1024
    %v58 = vmul.u32 %v54, 128
    %v59 = vstv %s57
    %v60 = vadd.s32 %v59, %v58
    %v61 = vadd.s32 %v60, %v56
    %vm62 = vcmp.lt.s32.totalorder %v61, 200
    %v63 = vsel %vm62, %v52, 0.0
    %v64 = vld [vmem:[#allocation2] sm:$0xff]
    %v65 = vadd.f32 %v63, 0.0
    %v66 = vadd.f32 %v64, %v65
    %67 = vst [vmem:[#allocation2] sm:$0xff] %v66
    // Predicated region
    $region14: #{fcos_iou_loss.1} parent=1 // pred_check
      %p68 = pneg %p12
    $region15: #{fcos_iou_loss.1} parent=1 // pred_check_branch
      %70 = sbr.rel (%p68) target = $region17
    $region16: #{fcos_iou_loss.1} parent=1 // pred_region
      %v71 = vld [vmem:[#allocation2] sm:$0xff]
      %72 = vadd.xlane.f32.xlu0 %v71
      %v73 = vpop.xlane.xlu0 %72
      %v74 = vrot.slane %v73, 4
      %v75 = vadd.f32 %v73, %v74
      %v76 = vrot.slane %v75, 2
      %v77 = vadd.f32 %v75, %v76
      %v78 = vrot.slane %v77, 1
      %v79 = vadd.f32 %v77, %v78
      %s80 = vtos %v79
      %s81 = scalar_lea.smem [#allocation3], 0
      %82 = sst [smem:[%s81]] %s80
    $region17: #{fcos_iou_loss.1} parent=1 // pred_fallthru
      _
    // Predicated region
    $region18: #{fcos_iou_loss.1} parent=1 // pred_check
      _
    $region19: #{fcos_iou_loss.1} parent=1 // pred_check_branch
      %84 = sbr.rel (0) target = $region21
    $region20: #{fcos_iou_loss.1} parent=1 // pred_region
      %s86 = ssub.s32 16, 16
      %87 = vsyncadd [#allocation4], %s86
      %90 = dma.smem_to_hbm [#allocation3], 16, %s2, [#allocation4]
    $region21: #{fcos_iou_loss.1} parent=1 // pred_fallthru
      _
    // Predicated region
    $region22: #{fcos_iou_loss.1} parent=1 // pred_check
      _
    $region23: #{fcos_iou_loss.1} parent=1 // pred_check_branch
      %92 = sbr.rel (0) target = $region25
    $region24: #{fcos_iou_loss.1} parent=1 // pred_region
      %93 = dma.done [#allocation4], 16
    $region25: #{fcos_iou_loss.1} parent=1 // pred_fallthru
      _
    %94 = sfence
    %95 = vsyncpa [#allocation4], 1

</llo_original>
